<compile_context>
chip_gen: v6e
topology: v6e:2x2x1
jax: 0.10.0
libtpu: 0.0.40
codegen_flags: <defaults>
</compile_context>

<pallas_src>
import math

import jax
import jax.numpy as jnp
from jax.experimental import pallas as pl
from jax.experimental.pallas import tpu as pltpu


# ----------------------------------------------------------------------------
# Kernel: out = f32(x) * scale - bias
# (u8->f32 convert + one vmul + one vsub; scale/bias broadcast from (rb, 1)
#  across the lane axis)
# ----------------------------------------------------------------------------
def _normalize_kernel(x_ref, scale_ref, bias_ref, out_ref):
    x = x_ref[...].astype(jnp.float32)
    out_ref[...] = x * scale_ref[...] - bias_ref[...]


# ----------------------------------------------------------------------------
# Block / layout selection
# ----------------------------------------------------------------------------
def _largest_divisor(n, multiple, cap):
    """Largest divisor of n that is a multiple of `multiple` and <= cap (or None)."""
    best = None
    cap = min(cap, n)
    for d in range(multiple, cap + 1, multiple):
        if n % d == 0:
            best = d
    return best


def _pick_blocks(R, L, in_itemsize, *, budget_bytes=2 << 20):
    """Pick (row_block, lane_block) for a (R, L) slab.

    * Keeps one in+out block <= budget_bytes (~2 MiB): double-buffered that is
      well under v5e's 16 MiB default scoped VMEM and v7x's 32 MiB scoped
      (64 MiB physical) — no generation-specific headroom is assumed.
    * Forces >= 2 grid steps when possible so v7x's two TensorCores both get
      work under dimension_semantics=("parallel", "parallel").
    """
    row_align = 32 if in_itemsize == 1 else 8  # u8 packs 4x along sublanes
    bytes_per_elem = in_itemsize + 4           # input + f32 output

    rb = (_largest_divisor(R, row_align, min(R, 1024))
          or _largest_divisor(R, 8, min(R, 1024))
          or R)
    max_lb = max(128, (budget_bytes // max(rb * bytes_per_elem, 1)) // 128 * 128)
    lb = _largest_divisor(L, 128, min(L, max_lb)) or L

    if R // rb == 1 and L // lb == 1:          # single step -> try to split for v7x
        if L >= 256:
            lb = _largest_divisor(L, 128, L // 2) or lb
        elif R >= 2 * row_align:
            rb = _largest_divisor(R, row_align, R // 2) or rb
    return rb, lb


def _pack_layout(R0, L0):
    """Fold factor k and padded lane length so rows % 8 == 0 and lanes % 128 == 0."""
    k = 8 // math.gcd(R0, 8)
    chunk = 128 * k
    L_pad = ((L0 + chunk - 1) // chunk) * chunk
    return k, L_pad


def normalize_packed(x, scale_rows, bias_rows):
    """x: (R, L) slab, R % 8 == 0, L % 128 == 0. Returns f32 (R, L)."""
    R, L = x.shape
    in_itemsize = jnp.dtype(x.dtype).itemsize
    rb, lb = _pick_blocks(R, L, in_itemsize)
    grid = (R // rb, L // lb)

    cost = pl.CostEstimate(
        flops=2 * R * L,
        transcendentals=0,
        bytes_accessed=R * L * (in_itemsize + 4) + 2 * R * 4,
    )

    return pl.pallas_call(
        _normalize_kernel,
        out_shape=jax.ShapeDtypeStruct((R, L), jnp.float32),
        grid=grid,
        in_specs=[
            pl.BlockSpec((rb, lb), lambda i, j: (i, j)),
            pl.BlockSpec((rb, 1), lambda i, j: (i, 0)),
            pl.BlockSpec((rb, 1), lambda i, j: (i, 0)),
        ],
        out_specs=pl.BlockSpec((rb, lb), lambda i, j: (i, j)),
        compiler_params=pltpu.CompilerParams(
            dimension_semantics=("parallel", "parallel"),
            vmem_limit_bytes=16 << 20,  # safe on v5e/v6e/v7x; usage is << limit
        ),
        cost_estimate=cost,
    )(x, scale_rows, bias_rows)


# ----------------------------------------------------------------------------
# Preprocessor wrapper (mirrors the nn.Module)
# ----------------------------------------------------------------------------
class Preprocessor:
    def __init__(self):
        mean = jnp.array([0.485, 0.456, 0.406], dtype=jnp.float32)
        std = jnp.array([0.229, 0.224, 0.225], dtype=jnp.float32)
        # Folded constants: (x/255 - mean)/std == x*scale - bias
        self._scale_c = 1.0 / (255.0 * std)
        self._bias_c = mean / std
        self._row_cache = {}  # (N, k) -> (scale_rows, bias_rows), built once per batch

    def _rows(self, N, k):
        key = (N, k)
        if key not in self._row_cache:
            # Row r of the folded slab corresponds to channel (r // k) % 3.
            sc = jnp.repeat(jnp.tile(self._scale_c, N), k).reshape(N * 3 * k, 1)
            bi = jnp.repeat(jnp.tile(self._bias_c, N), k).reshape(N * 3 * k, 1)
            self._row_cache[key] = (sc, bi)
        return self._row_cache[key]

    def __call__(self, patch, amask):
        N, C, H, W = patch.shape
        assert C == 3, "Preprocessor normalizes 3-channel (RGB) patches"
        R0, L0 = N * C, H * W

        # Lane-pad to a multiple of 128*k and row-fold by k so the kernel sees a
        # fully-occupied (rows % 8 == 0, lanes % 128 == 0) slab in the NATIVE dtype.
        k, L_pad = _pack_layout(R0, L0)
        x = patch.reshape(R0, L0)
        if L_pad != L0:
            x = jnp.pad(x, ((0, 0), (0, L_pad - L0)))
        x = x.reshape(R0 * k, L_pad // k)

        scale_rows, bias_rows = self._rows(N, k)
        out = normalize_packed(x, scale_rows, bias_rows)

        out = out.reshape(R0, L_pad)
        if L_pad != L0:
            out = out[:, :L0]
        patch_4d = out.reshape(N, C, H, W)

        # Mask path: pure unsqueeze + bool cast, no arithmetic -> plain jnp.
        amask_3d = amask.astype(jnp.bool_)[None, :, :]
        return patch_4d, amask_3d


if __name__ == "__main__":
    key = jax.random.PRNGKey(0)
    kp, km, kp2, km2 = jax.random.split(key, 4)

    mean_ref = jnp.array([0.485, 0.456, 0.406], jnp.float32).reshape(1, 3, 1, 1)
    std_ref = jnp.array([0.229, 0.224, 0.225], jnp.float32).reshape(1, 3, 1, 1)
    pre = Preprocessor()

    # Case 1: uint8 NCHW patch, H*W already a multiple of 128*k -> no padding.
    # (2, 3, 16, 64): folds to a (24, 256) u8 slab, grid splits lanes into 2 blocks.
    N, C, H, W = 2, 3, 16, 64
    patch_u8 = jax.random.randint(kp, (N, C, H, W), 0, 256, dtype=jnp.int32).astype(jnp.uint8)
    amask = (jax.random.uniform(km, (H, W), dtype=jnp.float32) > 0.5).astype(jnp.float32)

    patch_4d, amask_3d = pre(patch_u8, amask)
    jax.block_until_ready((patch_4d, amask_3d))

    ref_patch = (patch_u8.astype(jnp.float32) / 255.0 - mean_ref) / std_ref
    ref_mask = (amask != 0)[None, :, :]
    assert patch_4d.shape == (N, C, H, W) and patch_4d.dtype == jnp.float32
    assert amask_3d.shape == (1, H, W) and amask_3d.dtype == jnp.bool_
    assert jnp.allclose(patch_4d, ref_patch, atol=1e-5, rtol=1e-5)
    assert jnp.array_equal(amask_3d, ref_mask)

    # Case 2: float32 patch with H*W NOT a multiple of 128 -> exercises lane padding.
    N2, H2, W2 = 1, 20, 24  # H*W = 480, folded/padded to a (24, 128) slab
    patch_f32 = jax.random.uniform(kp2, (N2, C, H2, W2), dtype=jnp.float32) * 255.0
    amask2 = (jax.random.uniform(km2, (H2, W2), dtype=jnp.float32) > 0.5).astype(jnp.float32)

    patch_4d2, amask_3d2 = pre(patch_f32, amask2)
    jax.block_until_ready((patch_4d2, amask_3d2))

    ref_patch2 = (patch_f32 / 255.0 - mean_ref) / std_ref
    ref_mask2 = (amask2 != 0)[None, :, :]
    assert patch_4d2.shape == (N2, C, H2, W2) and patch_4d2.dtype == jnp.float32
    assert amask_3d2.shape == (1, H2, W2) and amask_3d2.dtype == jnp.bool_
    assert jnp.allclose(patch_4d2, ref_patch2, atol=1e-5, rtol=1e-5)
    assert jnp.array_equal(amask_3d2, ref_mask2)

    print("KERNEL_OK")
</pallas_src>

<mosaic_0001>
module attributes {stable_mosaic.version = 11 : i64} {
  func.func @_normalize_kernel(%arg0: i32, %arg1: i32, %arg2: memref<24x128xi8, #tpu.memory_space<vmem>>, %arg3: memref<24x1xf32, #tpu.memory_space<vmem>>, %arg4: memref<24x1xf32, #tpu.memory_space<vmem>>, %arg5: memref<24x128xf32, #tpu.memory_space<vmem>>) attributes {dimension_semantics = [#tpu.dimension_semantics<parallel>, #tpu.dimension_semantics<parallel>], iteration_bounds = array<i64: 1, 2>, scalar_prefetch = 0 : i64, scratch_operands = 0 : i64, tpu.core_type = #tpu.core_type<tc>, window_params = [{transform_indices = @transform_0, window_bounds = array<i64: 24, 128>}, {transform_indices = @transform_1, window_bounds = array<i64: 24, 1>}, {transform_indices = @transform_2, window_bounds = array<i64: 24, 1>}, {transform_indices = @transform_3, window_bounds = array<i64: 24, 128>}]} {
    %c0 = arith.constant 0 : index
    %c0_0 = arith.constant 0 : index
    %0 = vector.load %arg2[%c0, %c0_0] : memref<24x128xi8, #tpu.memory_space<vmem>>, vector<24x128xi8>
    %1 = arith.uitofp %0 : vector<24x128xi8> to vector<24x128xf32>
    %c0_1 = arith.constant 0 : index
    %c0_2 = arith.constant 0 : index
    %2 = vector.load %arg3[%c0_1, %c0_2] : memref<24x1xf32, #tpu.memory_space<vmem>>, vector<24x1xf32>
    %3 = vector.broadcast %2 : vector<24x1xf32> to vector<24x128xf32>
    %4 = arith.mulf %1, %3 : vector<24x128xf32>
    %c0_3 = arith.constant 0 : index
    %c0_4 = arith.constant 0 : index
    %5 = vector.load %arg4[%c0_3, %c0_4] : memref<24x1xf32, #tpu.memory_space<vmem>>, vector<24x1xf32>
    %6 = vector.broadcast %5 : vector<24x1xf32> to vector<24x128xf32>
    %7 = arith.subf %4, %6 : vector<24x128xf32>
    %c0_5 = arith.constant 0 : index
    %c0_6 = arith.constant 0 : index
    %8 = vector.load %arg5[%c0_5, %c0_6] : memref<24x128xf32, #tpu.memory_space<vmem>>, vector<24x128xf32>
    tpu.vector_store %arg5[%c0_5, %c0_6], %7 {strides = array<i32>} : memref<24x128xf32, #tpu.memory_space<vmem>>, vector<24x128xf32>,
    return
  }
  func.func @transform_0(%arg0: i32, %arg1: i32) -> (i32, i32) {
    %c0_i32 = arith.constant 0 : i32
    return %arg0, %arg1 : i32, i32
  }
  func.func @transform_1(%arg0: i32, %arg1: i32) -> (i32, i32) {
    %c0_i32 = arith.constant 0 : i32
    %c0_i32_0 = arith.constant 0 : i32
    return %arg0, %c0_i32 : i32, i32
  }
  func.func @transform_2(%arg0: i32, %arg1: i32) -> (i32, i32) {
    %c0_i32 = arith.constant 0 : i32
    %c0_i32_0 = arith.constant 0 : i32
    return %arg0, %c0_i32 : i32, i32
  }
  func.func @transform_3(%arg0: i32, %arg1: i32) -> (i32, i32) {
    %c0_i32 = arith.constant 0 : i32
    return %arg0, %arg1 : i32, i32
  }
}

</mosaic_0001>

<llo_original>
// kernel: tpu_custom_call.1
$region0: #{tpu_custom_call.1}
  #allocation0 [shape = 'u32[]', space=smem, size = 0x4, offset = 0x4, fixed_abs, tag = 'smem constant byte address 0x4 - core index']
  #allocation1 [shape = 'u32[144,128]{1,0:T(1,128)}', space=vmem, size = 0x12000, scoped, tag = 'internal scratch']
  %s0 = inlined_call_operand.vmem [shape: u8[24,256], index: 0, kind: input, shape index: {}]
  %s1 = inlined_call_operand.vmem [shape: f32[24,1], index: 1, kind: input, shape index: {}]
  %s2 = inlined_call_operand.vmem [shape: f32[24,1], index: 2, kind: input, shape index: {}]
  %s3 = inlined_call_operand.hbm [shape: f32[24,256], index: 3, kind: output, shape index: {}]
  %s4 = sld [smem:[#allocation0]]
  $region79: #{tpu_custom_call.1} parent=0
    _
  %s6 = ssub.s32 1, %s4
  %s7 = scalar_select 0, %s6, %s4
  $region1: #{tpu_custom_call.1} parent=0
    #allocation2 [shape = 'u8[6144]{0}', space=vmem, size = 0x1800, scoped, tag = 'input window, operand 0']
    #allocation3 [shape = 'u8[24576]{0}', space=vmem, size = 0x6000, scoped, tag = 'output window, operand 0']
    #allocation4 [shape = 's32[2]{0}', space=sflag, size = 0x8, scoped, tag = 'scoped memory for tpu_custom_call.1']
    %8 = vsyncpa [#allocation4], 0
    %s9 = scalar_lea.sflag [#allocation4], 1
    %10 = vsyncpa %s9, 0
    loop: start=0, step=1, limit=4
    $region2: #{tpu_custom_call.1} parent=1 // loop_pre_header
      _
    $region3: #{tpu_custom_call.1} parent=1 // loop_header
      %s12 = sphi 0, %s16
      %p13 = scmp.ge.s32.totalorder %s12, 4
      %s19 = sphi 0, %s31
      %s20 = sphi 0, %s27
      %s21 = sphi 0, %s19
      %s22 = sphi 0, %s20
      %s23 = sphi 0, %s21
      %s24 = sphi 0, %s22
      %s36 = sphi 0, %s38
      %s39 = sphi 0, %s36
      %s40 = sphi 0, %s39
      %s56 = sphi 0, %s40
      %s62 = sphi 0, %s64
      %s65 = sphi 0, %s62
      %s66 = sphi 0, %s65
      %s82 = sphi 0, %s66
      %s88 = sphi 0, %s90
      %s91 = sphi 0, %s88
      %s92 = sphi 0, %s91
      %s108 = sphi 0, %s92
      %s116 = sphi 0, %s118
      %s119 = sphi 0, %s116
      %s120 = sphi 0, %s119
      %s136 = sphi 0, %s120
    $region4: #{tpu_custom_call.1} parent=1 // loop_header_branch
      %15 = sbr.rel (%p13) target = $region8
    $region5: #{tpu_custom_call.1} parent=1 // loop_body
      %s17 = ssub.s32 %s12, 1
      %s18 = ssub.s32 %s12, 2
      %s25 = sadd.s32 1, %s20
      %p26 = scmp.ge.s32.totalorder %s25, 2
      %s27 = scalar_select %p26, 0, %s25
      %s28 = sadd.s32 1, %s19
      %s29 = scalar_select %p26, %s28, %s19
      %p30 = scmp.ge.s32.totalorder %s29, 1
      %s31 = scalar_select %p30, 0, %s29
      %s32 = ssub.s32 %s19, %s31
      %s33 = ssub.s32 %s20, %s27
      %s34 = sor.u32 %s32, %s33
      %p35 = scmp.eq.s32.totalorder %s34, 0
      %s37 = sadd.s32 %s36, 1
      %s38 = scalar_select %p35, %s36, %s37
      %p41 = pneg %p35
      %p42 = scmp.eq.s32.totalorder %s12, 1
      %p43 = por %p41, %p42
      %p44 = scmp.ne.s32.totalorder %s36, %s39
      %p45 = scmp.eq.s32.totalorder %s12, 0
      %p46 = por %p44, %p45
      %p47 = scmp.ne.s32.totalorder %s36, %s39
      %p48 = scmp.eq.s32.totalorder %s17, 1
      %p49 = por %p47, %p48
      %p50 = scmp.ne.s32.totalorder %s39, %s40
      %p51 = scmp.eq.s32.totalorder %s17, 0
      %p52 = por %p50, %p51
      %p53 = scmp.ne.s32.totalorder %s39, %s40
      %p54 = scmp.eq.s32.totalorder %s18, 1
      %p55 = por %p53, %p54
      %p57 = scmp.ne.s32.totalorder %s40, %s56
      %p58 = scmp.eq.s32.totalorder %s18, 0
      %p59 = por %p57, %p58
      %s60 = ssub.s32 %s19, %s31
      %p61 = scmp.eq.s32.totalorder %s60, 0
      %s63 = sadd.s32 %s62, 1
      %s64 = scalar_select %p61, %s62, %s63
      %p67 = pneg %p61
      %p68 = scmp.eq.s32.totalorder %s12, 1
      %p69 = por %p67, %p68
      %p70 = scmp.ne.s32.totalorder %s62, %s65
      %p71 = scmp.eq.s32.totalorder %s12, 0
      %p72 = por %p70, %p71
      %p73 = scmp.ne.s32.totalorder %s62, %s65
      %p74 = scmp.eq.s32.totalorder %s17, 1
      %p75 = por %p73, %p74
      %p76 = scmp.ne.s32.totalorder %s65, %s66
      %p77 = scmp.eq.s32.totalorder %s17, 0
      %p78 = por %p76, %p77
      %p79 = scmp.ne.s32.totalorder %s65, %s66
      %p80 = scmp.eq.s32.totalorder %s18, 1
      %p81 = por %p79, %p80
      %p83 = scmp.ne.s32.totalorder %s66, %s82
      %p84 = scmp.eq.s32.totalorder %s18, 0
      %p85 = por %p83, %p84
      %s86 = ssub.s32 %s19, %s31
      %p87 = scmp.eq.s32.totalorder %s86, 0
      %s89 = sadd.s32 %s88, 1
      %s90 = scalar_select %p87, %s88, %s89
      %p93 = pneg %p87
      %p94 = scmp.eq.s32.totalorder %s12, 1
      %p95 = por %p93, %p94
      %p96 = scmp.ne.s32.totalorder %s88, %s91
      %p97 = scmp.eq.s32.totalorder %s12, 0
      %p98 = por %p96, %p97
      %p99 = scmp.ne.s32.totalorder %s88, %s91
      %p100 = scmp.eq.s32.totalorder %s17, 1
      %p101 = por %p99, %p100
      %p102 = scmp.ne.s32.totalorder %s91, %s92
      %p103 = scmp.eq.s32.totalorder %s17, 0
      %p104 = por %p102, %p103
      %p105 = scmp.ne.s32.totalorder %s91, %s92
      %p106 = scmp.eq.s32.totalorder %s18, 1
      %p107 = por %p105, %p106
      %p109 = scmp.ne.s32.totalorder %s92, %s108
      %p110 = scmp.eq.s32.totalorder %s18, 0
      %p111 = por %p109, %p110
      %s112 = ssub.s32 %s19, %s31
      %s113 = ssub.s32 %s20, %s27
      %s114 = sor.u32 %s112, %s113
      %p115 = scmp.eq.s32.totalorder %s114, 0
      %s117 = sadd.s32 %s116, 1
      %s118 = scalar_select %p115, %s116, %s117
      %p121 = pneg %p115
      %p122 = scmp.eq.s32.totalorder %s12, 1
      %p123 = por %p121, %p122
      %p124 = scmp.ne.s32.totalorder %s116, %s119
      %p125 = scmp.eq.s32.totalorder %s12, 0
      %p126 = por %p124, %p125
      %p127 = scmp.ne.s32.totalorder %s116, %s119
      %p128 = scmp.eq.s32.totalorder %s17, 1
      %p129 = por %p127, %p128
      %p130 = scmp.ne.s32.totalorder %s119, %s120
      %p131 = scmp.eq.s32.totalorder %s17, 0
      %p132 = por %p130, %p131
      %p133 = scmp.ne.s32.totalorder %s119, %s120
      %p134 = scmp.eq.s32.totalorder %s18, 1
      %p135 = por %p133, %p134
      %p137 = scmp.ne.s32.totalorder %s120, %s136
      %p138 = scmp.eq.s32.totalorder %s18, 0
      %p139 = por %p137, %p138
      %p140 = scmp.le.s32.totalorder 1, %s12
      %p141 = scmp.lt.s32.totalorder %s12, 3
      %p142 = pnand %p140, %p141
      %p143 = pneg %p142
      // Predicated region
      $region9: #{tpu_custom_call.1} parent=5 // pred_check
        _
      $region10: #{tpu_custom_call.1} parent=5 // pred_check_branch
        %145 = sbr.rel (%p142) target = $region12
      $region11: #{tpu_custom_call.1} parent=5 // pred_region
        %s146 = ssub.s32 %s12, 1
        // Predicated region
        $region13: #{tpu_custom_call.1} parent=11 // pred_check
          %p147 = pneg %p78
        $region14: #{tpu_custom_call.1} parent=11 // pred_check_branch
          %149 = sbr.rel (%p147) target = $region16
        $region15: #{tpu_custom_call.1} parent=11 // pred_region
          %s150 = smul.u32 3, %s21
          %p151 = scmp.lt.s32.totalorder %s150, 2
          %s152 = scalar_select %p151, %s150, 2
          %s153 = smul.addr %s152, 8
          %s154 = scalar_lea.vmem %s1, %s153
          %s155 = smul.u32 3, %s21
        $region16: #{tpu_custom_call.1} parent=11 // pred_fallthru
          _
        // Predicated region
        $region17: #{tpu_custom_call.1} parent=11 // pred_check
          %p156 = pneg %p104
        $region18: #{tpu_custom_call.1} parent=11 // pred_check_branch
          %158 = sbr.rel (%p156) target = $region20
        $region19: #{tpu_custom_call.1} parent=11 // pred_region
          %s159 = smul.u32 3, %s21
          %p160 = scmp.lt.s32.totalorder %s159, 2
          %s161 = scalar_select %p160, %s159, 2
          %s162 = smul.addr %s161, 8
          %s163 = scalar_lea.vmem %s2, %s162
          %s164 = smul.u32 3, %s21
        $region20: #{tpu_custom_call.1} parent=11 // pred_fallthru
          _
      $region12: #{tpu_custom_call.1} parent=5 // pred_fallthru
        _
      %p165 = scmp.lt.s32.totalorder %s12, 2
      // Predicated region
      $region21: #{tpu_custom_call.1} parent=5 // pred_check
        %p166 = pneg %p165
      $region22: #{tpu_custom_call.1} parent=5 // pred_check_branch
        %168 = sbr.rel (%p166) target = $region24
      $region23: #{tpu_custom_call.1} parent=5 // pred_region
        // Predicated region
        $region25: #{tpu_custom_call.1} parent=23 // pred_check
          %p169 = pneg %p46
        $region26: #{tpu_custom_call.1} parent=23 // pred_check_branch
          %171 = sbr.rel (%p169) target = $region28
        $region27: #{tpu_custom_call.1} parent=23 // pred_region
          %s172 = sand.u32 %s36, 1
          %s173 = sand.u32 %s36, 1
          %s174 = smul.addr %s173, 6
          %s175 = scalar_lea.vmem [#allocation2], %s174
          %s176 = smul.u32 3, %s19
          %s177 = smul.addr %s176, 2
          %s178 = sadd.s32 %s20, %s177
          %s179 = smul.addr %s178, 2
          %s180 = scalar_lea.vmem %s0, %s179
          // Predicated region
          $region29: #{tpu_custom_call.1} parent=27 // pred_check
            _
          $region30: #{tpu_custom_call.1} parent=27 // pred_check_branch
            %182 = sbr.rel (0) target = $region32
          $region31: #{tpu_custom_call.1} parent=27 // pred_region
            // Predicated region
            $region33: #{tpu_custom_call.1} parent=31 // pred_check
              _
            $region34: #{tpu_custom_call.1} parent=31 // pred_check_branch
              %184 = sbr.rel target = $region36
            $region35: #{tpu_custom_call.1} parent=31 // pred_region
              // Predicated region
              $region48: #{tpu_custom_call.1} parent=35 // pred_check
                _
              $region49: #{tpu_custom_call.1} parent=35 // pred_check_branch
                %204 = sbr.rel (0) target = $region51
              $region50: #{tpu_custom_call.1} parent=35 // pred_region
                %s206 = ssub.s32 4, 1
                loop: start=0, step=1, limit=1
                $region52: #{tpu_custom_call.1} parent=50 // loop_pre_header
                  _
                $region53: #{tpu_custom_call.1} parent=50 // loop_header
                  %s208 = sphi 0, %s212
                  %p209 = scmp.ge.s32.totalorder %s208, 1
                  %s213 = sphi %s180, %s180
                  %s214 = sphi %s175, %s175
                $region54: #{tpu_custom_call.1} parent=50 // loop_header_branch
                  %211 = sbr.rel (%p209) target = $region58
                $region55: #{tpu_custom_call.1} parent=50 // loop_body
                  %v215 = vld [vmem:[%s213] sm:%s206]
                  %216 = vst [vmem:[%s214] sm:%s206] %v215
                  %v217 = vld [vmem:[%s213 + $0x4] sm:%s206]
                  %218 = vst [vmem:[%s214 + $0x2] sm:%s206] %v217
                  %v219 = vld [vmem:[%s213 + $0x8] sm:%s206]
                  %220 = vst [vmem:[%s214 + $0x4] sm:%s206] %v219
                $region56: #{tpu_custom_call.1} parent=50 // loop_footer
                  %s212 = sadd.s32 1, %s208
                $region57: #{tpu_custom_call.1} parent=50 // loop_footer_branch
                  %207 = sbr.rel target = $region53
                $region58: #{tpu_custom_call.1} parent=50 // loop_exit
                  _
              $region51: #{tpu_custom_call.1} parent=35 // pred_fallthru
                _
            $region36: #{tpu_custom_call.1} parent=31 // pred_fallthru
              _
            // Predicated region
            $region37: #{tpu_custom_call.1} parent=31 // pred_check
              _
            $region38: #{tpu_custom_call.1} parent=31 // pred_check_branch
              %186 = sbr.rel (0) target = $region40
            $region39: #{tpu_custom_call.1} parent=31 // pred_region
              %s188 = ssub.s32 4, 1
              loop: start=0, step=1, limit=1
              $region41: #{tpu_custom_call.1} parent=39 // loop_pre_header
                _
              $region42: #{tpu_custom_call.1} parent=39 // loop_header
                %s190 = sphi 0, %s194
                %p191 = scmp.ge.s32.totalorder %s190, 1
                %s195 = sphi %s180, %s180
                %s196 = sphi %s175, %s175
              $region43: #{tpu_custom_call.1} parent=39 // loop_header_branch
                %193 = sbr.rel (%p191) target = $region47
              $region44: #{tpu_custom_call.1} parent=39 // loop_body
                %v197 = vld [vmem:[%s195] sm:%s188]
                %198 = vst [vmem:[%s196] sm:%s188] %v197
                %v199 = vld [vmem:[%s195 + $0x4] sm:%s188]
                %200 = vst [vmem:[%s196 + $0x2] sm:%s188] %v199
                %v201 = vld [vmem:[%s195 + $0x8] sm:%s188]
                %202 = vst [vmem:[%s196 + $0x4] sm:%s188] %v201
              $region45: #{tpu_custom_call.1} parent=39 // loop_footer
                %s194 = sadd.s32 1, %s190
              $region46: #{tpu_custom_call.1} parent=39 // loop_footer_branch
                %189 = sbr.rel target = $region42
              $region47: #{tpu_custom_call.1} parent=39 // loop_exit
                _
            $region40: #{tpu_custom_call.1} parent=31 // pred_fallthru
              _
          $region32: #{tpu_custom_call.1} parent=27 // pred_fallthru
            _
          %221 = vnop
        $region28: #{tpu_custom_call.1} parent=23 // pred_fallthru
          _
      $region24: #{tpu_custom_call.1} parent=5 // pred_fallthru
        _
      %p222 = scmp.le.s32.totalorder 1, %s12
      %p223 = scmp.lt.s32.totalorder %s12, 3
      %p224 = pnand %p222, %p223
      %p225 = pneg %p224
      // Predicated region
      $region59: #{tpu_custom_call.1} parent=5 // pred_check
        _
      $region60: #{tpu_custom_call.1} parent=5 // pred_check_branch
        %227 = sbr.rel (%p224) target = $region62
      $region61: #{tpu_custom_call.1} parent=5 // pred_region
        %s228 = ssub.s32 %s12, 1
        %s229 = sand.u32 %s39, 1
        %s230 = sand.u32 %s39, 1
        %s231 = smul.addr %s230, 6
        %s232 = scalar_lea.vmem [#allocation2], %s231
        // Predicated region
        $region63: #{tpu_custom_call.1} parent=61 // pred_check
          %p233 = pneg %p52
        $region64: #{tpu_custom_call.1} parent=61 // pred_check_branch
          %235 = sbr.rel (%p233) target = $region66
        $region65: #{tpu_custom_call.1} parent=61 // pred_region
          _
        $region66: #{tpu_custom_call.1} parent=61 // pred_fallthru
          _
        %s236 = sand.u32 %s39, 1
        %s237 = sand.u32 %s39, 1
        %s238 = smul.addr %s237, 6
        %s239 = scalar_lea.vmem [#allocation2], %s238
        %p240 = pneg %p52
        %p241 = pneg %p49
        %s242 = smul.u32 3, %s21
        %p243 = scmp.lt.s32.totalorder %s242, 2
        %s244 = scalar_select %p243, %s242, 2
        %s245 = smul.addr %s244, 8
        %s246 = scalar_lea.vmem %s1, %s245
        %p247 = pneg %p78
        %p248 = pneg %p75
        %s249 = smul.u32 3, %s21
        %p250 = scmp.lt.s32.totalorder %s249, 2
        %s251 = scalar_select %p250, %s249, 2
        %s252 = smul.addr %s251, 8
        %s253 = scalar_lea.vmem %s2, %s252
        %p254 = pneg %p104
        %p255 = pneg %p101
        %p256 = pneg %p132
        %p257 = pneg %p129
        %s258 = sand.u32 %s119, 1
        %s259 = scalar_lea.sflag [#allocation4], %s258
        %s260 = sand.u32 %s119, 1
        %s261 = smul.addr %s260, 24
        %s262 = scalar_lea.vmem [#allocation3], %s261
        %s263 = smul.u32 3, %s21
        %s264 = smul.u32 3, %s21
        %p265 = scmp.lt.s32.totalorder %s264, 2
        %s266 = scalar_select %p265, %s264, 2
        %s267 = smul.addr %s266, 8
        %s268 = scalar_lea.vmem %s1, %s267
        %s269 = smul.u32 3, %s21
        %s270 = smul.u32 3, %s21
        %p271 = scmp.lt.s32.totalorder %s270, 2
        %s272 = scalar_select %p271, %s270, 2
        %s273 = smul.addr %s272, 8
        %s274 = scalar_lea.vmem %s2, %s273
        %s275 = smul.u32 3, %s21
        %s276 = smul.u32 3, %s21
        %v277 = vld [vmem:[%s232] sm:$0x3]
        %v278 = vld [vmem:[%s232 + $0x2] sm:$0x3]
        %v279 = vld [vmem:[%s232 + $0x4] sm:$0x3]
        %v280 = vunpack.c.0.s8 %v277
        %v281 = vunpack.c.0.s8 %v278
        %v282 = vunpack.c.0.s8 %v279
        %v283 = vand.u32 %v280, 255
        %v284 = vand.u32 %v281, 255
        %v285 = vand.u32 %v282, 255
        %v286 = vcvt.s32.f32 %v283
        %v287 = vcvt.s32.f32 %v284
        %v288 = vcvt.s32.f32 %v285
        %v289 = vld [vmem:[%s268] sm:$0xff]
        %v290 = vld [vmem:[%s268 + $0x8] sm:$0xff]
        %v291 = vld [vmem:[%s268 + $0x10] sm:$0xff]
        %293 = vset.pattern.permute.xlu0 0
        %294 = vperm.xlu0 %293, %v289
        %v295 = vpop.permute.xlu0 %294
        %298 = vset.pattern.permute.xlu0 0
        %299 = vperm.xlu0 %298, %v290
        %v300 = vpop.permute.xlu0 %299
        %303 = vset.pattern.permute.xlu0 0
        %304 = vperm.xlu0 %303, %v291
        %v305 = vpop.permute.xlu0 %304
        %v307 = vmul.f32 %v286, %v295
        %v308 = vmul.f32 %v287, %v300
        %v309 = vmul.f32 %v288, %v305
        %v310 = vld [vmem:[%s274] sm:$0xff]
        %v311 = vld [vmem:[%s274 + $0x8] sm:$0xff]
        %v312 = vld [vmem:[%s274 + $0x10] sm:$0xff]
        %314 = vset.pattern.permute.xlu0 0
        %315 = vperm.xlu0 %314, %v310
        %v316 = vpop.permute.xlu0 %315
        %319 = vset.pattern.permute.xlu0 0
        %320 = vperm.xlu0 %319, %v311
        %v321 = vpop.permute.xlu0 %320
        %324 = vset.pattern.permute.xlu0 0
        %325 = vperm.xlu0 %324, %v312
        %v326 = vpop.permute.xlu0 %325
        %v328 = vsub.f32 %v307, %v316
        %v329 = vsub.f32 %v308, %v321
        %v330 = vsub.f32 %v309, %v326
        %331 = vst [vmem:[%s262] sm:$0xff] %v328
        %332 = vst [vmem:[%s262 + $0x8] sm:$0xff] %v329
        %333 = vst [vmem:[%s262 + $0x10] sm:$0xff] %v330
        %s334 = sand.u32 %s119, 1
        %s335 = scalar_lea.sflag [#allocation4], %s334
        %s336 = sand.u32 %s119, 1
        %s337 = smul.addr %s336, 24
        %s338 = scalar_lea.vmem [#allocation3], %s337
        // Predicated region
        $region67: #{tpu_custom_call.1} parent=61 // pred_check
          %p339 = pneg %p129
        $region68: #{tpu_custom_call.1} parent=61 // pred_check_branch
          %341 = sbr.rel (%p339) target = $region70
        $region69: #{tpu_custom_call.1} parent=61 // pred_region
          %s342 = smul.u32 3, %s21
          %s344 = ssub.s32 384, 384
          %345 = vsyncadd %s335, %s344
          %s346 = smul.addr %s342, 2
          %s347 = sadd.s32 %s22, %s346
          %s348 = smul.addr %s347, 128
          %s349 = scalar_lea.hbm %s3, %s348
          %s350 = sshll.u32 %s338, 4
          %s351 = int_to_ptr.vmem [resolvable:$true] %s350
          %356 = dma.vmem_to_hbm [thread:$0]  %s351, 384, %s349, %s335, 128, 256, 8
        $region70: #{tpu_custom_call.1} parent=61 // pred_fallthru
          _
      $region62: #{tpu_custom_call.1} parent=5 // pred_fallthru
        _
      %p357 = scmp.le.s32.totalorder 2, %s12
      // Predicated region
      $region71: #{tpu_custom_call.1} parent=5 // pred_check
        %p358 = pneg %p357
      $region72: #{tpu_custom_call.1} parent=5 // pred_check_branch
        %360 = sbr.rel (%p358) target = $region74
      $region73: #{tpu_custom_call.1} parent=5 // pred_region
        %s361 = ssub.s32 %s12, 2
        // Predicated region
        $region75: #{tpu_custom_call.1} parent=73 // pred_check
          %p362 = pneg %p135
        $region76: #{tpu_custom_call.1} parent=73 // pred_check_branch
          %364 = sbr.rel (%p362) target = $region78
        $region77: #{tpu_custom_call.1} parent=73 // pred_region
          %s365 = sand.u32 %s120, 1
          %s366 = scalar_lea.sflag [#allocation4], %s365
          %s367 = sand.u32 %s120, 1
          %s368 = smul.addr %s367, 24
          %s369 = scalar_lea.vmem [#allocation3], %s368
          %370 = dma.done %s366, 384
        $region78: #{tpu_custom_call.1} parent=73 // pred_fallthru
          _
      $region74: #{tpu_custom_call.1} parent=5 // pred_fallthru
        _
    $region6: #{tpu_custom_call.1} parent=1 // loop_footer
      %s16 = sadd.s32 1, %s12
    $region7: #{tpu_custom_call.1} parent=1 // loop_footer_branch
      %11 = sbr.rel target = $region3
    $region8: #{tpu_custom_call.1} parent=1 // loop_exit
      _
    %371 = vsyncpa [#allocation4], 1
    %s372 = scalar_lea.sflag [#allocation4], 1
    %373 = vsyncpa %s372, 1

</llo_original>
